<compile_context>
chip_gen: v5e
topology: v5e:2x2
jax: 0.10.0
libtpu: 0.0.40
codegen_flags: <defaults>
</compile_context>

<pallas_src>
import functools

import jax
import jax.numpy as jnp
from jax.experimental import pallas as pl
from jax.experimental.pallas import tpu as pltpu


def _conv_gate(w_ref, s_cat):
    """y[o, t] = sum_j w2[o, j] * s_cat[j, t].

    For tiny channel counts (demo C=4) a broadcast-multiply + sublane reduce on the
    VPU is used (a sub-tile MXU matmul buys nothing in this HBM-bound kernel); for
    real channel counts the packed (C, 3C) @ (3C, Tt) MXU dot is used.
    """
    if w_ref.shape[0] < 8:
        return jnp.sum(w_ref[...][:, :, None] * s_cat[None, :, :], axis=1)
    return jnp.dot(w_ref[...], s_cat, preferred_element_type=jnp.float32)


def _se_kernel_tiled(x_halo_ref, x_ref, w_ref, o_ref, *, inv_f, halo):
    # x_halo_ref: (1, C, halo, F)  last `halo` time rows of the PREVIOUS tile
    #             (block index clamped to 0 at ti == 0; masked to the causal zeros).
    # x_ref:      (1, C, Tt, F)    current tile of x
    # w_ref:      (C, 3C)          taps packed as [k=0 -> s(t-2) | k=1 -> s(t-1) | k=2 -> s(t)]
    ti = pl.program_id(1)
    x_blk = x_ref[0]                                               # (C, Tt, F)
    t_tile = x_blk.shape[1]

    # AdaptiveAvgPool1d(1): lane reduce with f32 accumulation (no full f32 upcast).
    s_main = jnp.sum(x_blk, axis=-1, dtype=jnp.float32) * inv_f    # (C, Tt)

    # Causal halo: pooled values of the previous tile's last 2 time steps.
    s_halo = jnp.sum(x_halo_ref[0], axis=-1, dtype=jnp.float32) * inv_f   # (C, halo)
    s_halo = s_halo[:, halo - 2:halo] * (ti > 0).astype(jnp.float32)      # (C, 2); zeros at ti==0

    s_ext = jnp.concatenate([s_halo, s_main], axis=1)              # (C, Tt+2)
    s_cat = jnp.concatenate(
        [s_ext[:, 0:t_tile], s_ext[:, 1:t_tile + 1], s_ext[:, 2:t_tile + 2]],
        axis=0)                                                    # (3C, Tt)

    y = _conv_gate(w_ref, s_cat)                                   # (C, Tt) f32

    # Gate in f32 (as PyTorch does), single cast at the store.
    o_ref[0] = (x_blk * y[:, :, None]).astype(o_ref.dtype)


def _se_kernel_full(x_ref, w_ref, o_ref, *, inv_f):
    # Single-T-tile variant (whole sequence in one block): causal pad is just zeros.
    x_blk = x_ref[0]                                               # (C, T, F)
    c, t = x_blk.shape[0], x_blk.shape[1]
    s = jnp.sum(x_blk, axis=-1, dtype=jnp.float32) * inv_f         # (C, T)
    s_ext = jnp.concatenate([jnp.zeros((c, 2), jnp.float32), s], axis=1)
    s_cat = jnp.concatenate(
        [s_ext[:, 0:t], s_ext[:, 1:t + 1], s_ext[:, 2:t + 2]], axis=0)
    y = _conv_gate(w_ref, s_cat)                                   # (C, T) f32
    o_ref[0] = (x_blk * y[:, :, None]).astype(o_ref.dtype)


def _vmem_capacity_bytes():
    try:
        cap = getattr(pltpu.get_tpu_info(), "vmem_capacity_bytes", None)
        if cap:
            return int(cap)
    except Exception:
        pass
    return 64 << 20          # conservative default (v7x per-TC VMEM)


def _pick_t_tile(T, row_bytes, pack, target_bytes):
    """Largest pack-aligned divisor of T whose (C, tt, F) block fits the byte target."""
    if T * row_bytes <= target_bytes or T < pack:
        return T
    cands = [tt for tt in range(pack, T + 1, pack) if T % tt == 0]
    if not cands:
        # TODO(synk): T with no pack-aligned divisor (odd/prime T) falls back to one
        # full-T block instead of a ragged-last-tile masking path.
        return T
    fitting = [tt for tt in cands if tt * row_bytes <= target_bytes]
    return fitting[-1] if fitting else cands[0]


def se_channel_forward(x, w, *, t_tile=None):
    """SeChannelModule forward.

    x: (B, C, T, F)  -- same layout the PyTorch module consumes.
    w: (C, C, 3)     -- torch conv weight (C_out, C_in, 3, 1) with the trailing 1 squeezed.
    """
    B, C, T, F = x.shape
    assert w.shape == (C, C, 3), "weight must be (C_out, C_in, 3)"
    itemsize = jnp.dtype(x.dtype).itemsize
    pack = {4: 8, 2: 16, 1: 32}.get(itemsize, 8)   # native sublane pack per dtype

    # Lane-dense stores: pad F to the next multiple of 128 only when the relative
    # overhead is small (<= ~33%); mean uses 1/F_true so zero padding is unbiased.
    Fp = pl.cdiv(F, 128) * 128
    pad_f = (Fp != F) and (3 * (Fp - F) <= F)
    if not pad_f:
        Fp = F
    xp = jnp.pad(x, ((0, 0), (0, 0), (0, 0), (0, Fp - F))) if pad_f else x

    cap = _vmem_capacity_bytes()
    big_vmem = cap >= (100 << 20)                  # v5e/v6e: 128 MiB; v7x: 64 MiB
    target_block_bytes = (16 << 20) if big_vmem else (8 << 20)
    vmem_ceiling = (96 << 20) if big_vmem else (48 << 20)

    row_bytes = C * Fp * itemsize
    if t_tile is None:
        t_tile = _pick_t_tile(T, row_bytes, pack, target_block_bytes)
    assert T % t_tile == 0, "t_tile must divide T"
    n_t = T // t_tile
    if n_t > 1:
        assert t_tile % pack == 0, "t_tile must be a multiple of the sublane pack"

    block_bytes = t_tile * row_bytes
    halo_bytes = pack * row_bytes if n_t > 1 else 0
    vmem_limit = int(min(max(2 * (2 * block_bytes + halo_bytes) + (4 << 20), 16 << 20),
                         vmem_ceiling))

    # (C_out, C_in, k) -> (C_out, k*C + C_in): matches the tap packing in s_cat.
    w2 = jnp.transpose(w, (0, 2, 1)).reshape(C, 3 * C).astype(jnp.float32)

    inv_f = 1.0 / F
    flops = 2 * B * C * T * Fp + 6 * B * T * C * C
    halo_read = (B * C * T * Fp * pack // t_tile) if n_t > 1 else 0
    cost = pl.CostEstimate(
        flops=flops, transcendentals=0,
        bytes_accessed=int((2 * B * C * T * Fp + halo_read) * itemsize + w2.size * 4))

    if n_t == 1:
        out = pl.pallas_call(
            functools.partial(_se_kernel_full, inv_f=inv_f),
            out_shape=jax.ShapeDtypeStruct((B, C, T, Fp), x.dtype),
            grid_spec=pltpu.PrefetchScalarGridSpec(
                num_scalar_prefetch=0,
                grid=(B,),
                in_specs=[
                    pl.BlockSpec((1, C, T, Fp), lambda b: (b, 0, 0, 0)),
                    pl.BlockSpec((C, 3 * C), lambda b: (0, 0)),
                ],
                out_specs=pl.BlockSpec((1, C, T, Fp), lambda b: (b, 0, 0, 0)),
            ),
            compiler_params=pltpu.CompilerParams(
                dimension_semantics=("parallel",),
                vmem_limit_bytes=vmem_limit),
            cost_estimate=cost,
        )(xp, w2)
    else:
        halo = pack
        tt_blocks = t_tile // halo
        # Halo block = last `halo` time rows of the PREVIOUS tile; clamped to block 0
        # for ti == 0 (the kernel masks that case to the causal zero padding).
        halo_map = lambda b, t: (b, 0, jnp.maximum(t * tt_blocks - 1, 0), 0)
        out = pl.pallas_call(
            functools.partial(_se_kernel_tiled, inv_f=inv_f, halo=halo),
            out_shape=jax.ShapeDtypeStruct((B, C, T, Fp), x.dtype),
            grid_spec=pltpu.PrefetchScalarGridSpec(
                num_scalar_prefetch=0,
                grid=(B, n_t),
                in_specs=[
                    pl.BlockSpec((1, C, halo, Fp), halo_map),
                    pl.BlockSpec((1, C, t_tile, Fp), lambda b, t: (b, 0, t, 0)),
                    pl.BlockSpec((C, 3 * C), lambda b, t: (0, 0)),
                ],
                out_specs=pl.BlockSpec((1, C, t_tile, Fp), lambda b, t: (b, 0, t, 0)),
            ),
            # Tiles are independent (halo recompute) => both axes "parallel", which
            # keeps both TensorCores busy on v7x even at batch 1.
            compiler_params=pltpu.CompilerParams(
                dimension_semantics=("parallel", "parallel"),
                vmem_limit_bytes=vmem_limit),
            cost_estimate=cost,
        )(xp, xp, w2)
        # TODO(synk): input_output_aliases would halve the HBM footprint but is unsafe
        # here: halo blocks re-read rows whose aliased output may already be written.

    return out[..., :F] if pad_f else out


if __name__ == "__main__":
    key = jax.random.PRNGKey(0)
    kx, kw = jax.random.split(key)

    # Small shapes consistent with the module: (B, C, T, F); F=128 keeps lanes dense.
    B, C, T, F = 2, 4, 32, 128
    x = jax.random.normal(kx, (B, C, T, F), dtype=jnp.float32)
    # torch conv weight (C_out, C_in, 3, 1) with the trailing singleton squeezed.
    w = jax.random.normal(kw, (C, C, 3), dtype=jnp.float32) * 0.1

    # Pure-JAX reference matching the PyTorch module.
    s = jnp.mean(x, axis=-1)                              # (B, C, T)
    s_pad = jnp.pad(s, ((0, 0), (0, 0), (2, 0)))          # causal front pad on T
    y = sum(jnp.einsum("oi,bit->bot", w[:, :, k], s_pad[:, :, k:k + T],
                       precision="highest") for k in range(3))
    ref = x * y[..., None]

    # Multi-tile path (forced t_tile=16 -> 2 T tiles; exercises the causal halo).
    out_tiled = jax.block_until_ready(se_channel_forward(x, w, t_tile=16))
    # Auto-tiled path (this small shape picks a single full-T block).
    out_auto = jax.block_until_ready(se_channel_forward(x, w))

    assert out_tiled.shape == x.shape and out_auto.shape == x.shape
    assert jnp.allclose(out_tiled, ref, atol=1e-4, rtol=1e-4), "tiled kernel mismatch"
    assert jnp.allclose(out_auto, ref, atol=1e-4, rtol=1e-4), "full kernel mismatch"
    print("KERNEL_OK")
</pallas_src>

<mosaic_0001>
module attributes {stable_mosaic.version = 11 : i64} {
  func.func @_se_kernel_tiled(%arg0: i32, %arg1: i32, %arg2: memref<1x4x8x128xf32, #tpu.memory_space<vmem>>, %arg3: memref<1x4x16x128xf32, #tpu.memory_space<vmem>>, %arg4: memref<4x12xf32, #tpu.memory_space<vmem>>, %arg5: memref<1x4x16x128xf32, #tpu.memory_space<vmem>>) attributes {dimension_semantics = [#tpu.dimension_semantics<parallel>, #tpu.dimension_semantics<parallel>], iteration_bounds = array<i64: 2, 2>, scalar_prefetch = 0 : i64, scratch_operands = 0 : i64, tpu.core_type = #tpu.core_type<tc>, window_params = [{transform_indices = @transform_0, window_bounds = array<i64: 1, 4, 8, 128>}, {transform_indices = @transform_1, window_bounds = array<i64: 1, 4, 16, 128>}, {pipeline_mode = #tpu.pipeline_mode<synchronous>, transform_indices = @transform_2, window_bounds = array<i64: 4, 12>}, {transform_indices = @transform_3, window_bounds = array<i64: 1, 4, 16, 128>}]} {
    %c0 = arith.constant 0 : index
    %c0_0 = arith.constant 0 : index
    %c0_1 = arith.constant 0 : index
    %c0_2 = arith.constant 0 : index
    %0 = vector.load %arg3[%c0, %c0_0, %c0_1, %c0_2] : memref<1x4x16x128xf32, #tpu.memory_space<vmem>>, vector<1x4x16x128xf32>
    %1 = vector.shape_cast %0 : vector<1x4x16x128xf32> to vector<4x16x128xf32>
    %cst = arith.constant dense<0.000000e+00> : vector<4x16xf32>
    %2 = vector.multi_reduction <add>, %1, %cst [2] : vector<4x16x128xf32> to vector<4x16xf32>
    %cst_3 = arith.constant 7.812500e-03 : f32
    %3 = vector.broadcast %cst_3 : f32 to vector<4x16xf32>
    %4 = arith.mulf %2, %3 : vector<4x16xf32>
    %c0_4 = arith.constant 0 : index
    %c0_5 = arith.constant 0 : index
    %c0_6 = arith.constant 0 : index
    %c0_7 = arith.constant 0 : index
    %5 = vector.load %arg2[%c0_4, %c0_5, %c0_6, %c0_7] : memref<1x4x8x128xf32, #tpu.memory_space<vmem>>, vector<1x4x8x128xf32>
    %6 = vector.shape_cast %5 : vector<1x4x8x128xf32> to vector<4x8x128xf32>
    %cst_8 = arith.constant dense<0.000000e+00> : vector<4x8xf32>
    %7 = vector.multi_reduction <add>, %6, %cst_8 [2] : vector<4x8x128xf32> to vector<4x8xf32>
    %cst_9 = arith.constant 7.812500e-03 : f32
    %8 = vector.broadcast %cst_9 : f32 to vector<4x8xf32>
    %9 = arith.mulf %7, %8 : vector<4x8xf32>
    %10 = vector.extract_strided_slice %9 {offsets = [0, 6], sizes = [4, 2], strides = [1, 1]} : vector<4x8xf32> to vector<4x2xf32>
    %c0_i32 = arith.constant 0 : i32
    %11 = arith.cmpi sgt, %arg1, %c0_i32 : i32
    %12 = arith.extui %11 : i1 to i32
    %13 = arith.sitofp %12 : i32 to f32
    %14 = vector.broadcast %13 : f32 to vector<4x2xf32>
    %15 = arith.mulf %10, %14 : vector<4x2xf32>
    %16 = tpu.concatenate %15, %4 in 1 : vector<4x2xf32>, vector<4x16xf32> -> vector<4x18xf32>
    %17 = vector.extract_strided_slice %16 {offsets = [0, 0], sizes = [4, 16], strides = [1, 1]} : vector<4x18xf32> to vector<4x16xf32>
    %18 = vector.extract_strided_slice %16 {offsets = [0, 1], sizes = [4, 16], strides = [1, 1]} : vector<4x18xf32> to vector<4x16xf32>
    %19 = vector.extract_strided_slice %16 {offsets = [0, 2], sizes = [4, 16], strides = [1, 1]} : vector<4x18xf32> to vector<4x16xf32>
    %20 = tpu.concatenate %17, %18, %19 in 0 : vector<4x16xf32>, vector<4x16xf32>, vector<4x16xf32> -> vector<12x16xf32>
    %c0_10 = arith.constant 0 : index
    %c0_11 = arith.constant 0 : index
    %21 = vector.load %arg4[%c0_10, %c0_11] : memref<4x12xf32, #tpu.memory_space<vmem>>, vector<4x12xf32>
    %22 = vector.shape_cast %21 : vector<4x12xf32> to vector<4x12x1xf32>
    %23 = vector.shape_cast %20 : vector<12x16xf32> to vector<1x12x16xf32>
    %24 = vector.broadcast %22 : vector<4x12x1xf32> to vector<4x12x16xf32>
    %25 = vector.broadcast %23 : vector<1x12x16xf32> to vector<4x12x16xf32>
    %26 = arith.mulf %24, %25 : vector<4x12x16xf32>
    %cst_12 = arith.constant dense<0.000000e+00> : vector<4x16xf32>
    %27 = vector.multi_reduction <add>, %26, %cst_12 [1] : vector<4x12x16xf32> to vector<4x16xf32>
    %28 = vector.shape_cast %27 : vector<4x16xf32> to vector<4x16x1xf32>
    %29 = vector.broadcast %28 : vector<4x16x1xf32> to vector<4x16x128xf32>
    %30 = arith.mulf %1, %29 : vector<4x16x128xf32>
    %c0_13 = arith.constant 0 : index
    %c0_14 = arith.constant 0 : index
    %c0_15 = arith.constant 0 : index
    %c0_16 = arith.constant 0 : index
    %31 = vector.load %arg5[%c0_13, %c0_14, %c0_15, %c0_16] : memref<1x4x16x128xf32, #tpu.memory_space<vmem>>, vector<1x4x16x128xf32>
    %32 = vector.shape_cast %31 : vector<1x4x16x128xf32> to vector<4x16x128xf32>
    %33 = vector.shape_cast %30 : vector<4x16x128xf32> to vector<1x4x16x128xf32>
    tpu.vector_store %arg5[%c0_13, %c0_14, %c0_15, %c0_16], %33 {strides = array<i32>} : memref<1x4x16x128xf32, #tpu.memory_space<vmem>>, vector<1x4x16x128xf32>,
    return
  }
  func.func @transform_0(%arg0: i32, %arg1: i32) -> (i32, i32, i32, i32) {
    %c2_i32 = arith.constant 2 : i32
    %0 = arith.muli %arg1, %c2_i32 : i32
    %c1_i32 = arith.constant 1 : i32
    %1 = arith.subi %0, %c1_i32 : i32
    %c0_i32 = arith.constant 0 : i32
    %2 = arith.maxsi %1, %c0_i32 : i32
    %c0_i32_0 = arith.constant 0 : i32
    %c0_i32_1 = arith.constant 0 : i32
    %c0_i32_2 = arith.constant 0 : i32
    return %arg0, %c0_i32_0, %2, %c0_i32_1 : i32, i32, i32, i32
  }
  func.func @transform_1(%arg0: i32, %arg1: i32) -> (i32, i32, i32, i32) {
    %c0_i32 = arith.constant 0 : i32
    %c0_i32_0 = arith.constant 0 : i32
    %c0_i32_1 = arith.constant 0 : i32
    return %arg0, %c0_i32, %arg1, %c0_i32_0 : i32, i32, i32, i32
  }
  func.func @transform_2(%arg0: i32, %arg1: i32) -> (i32, i32) {
    %c0_i32 = arith.constant 0 : i32
    %c0_i32_0 = arith.constant 0 : i32
    %c0_i32_1 = arith.constant 0 : i32
    return %c0_i32, %c0_i32_0 : i32, i32
  }
  func.func @transform_3(%arg0: i32, %arg1: i32) -> (i32, i32, i32, i32) {
    %c0_i32 = arith.constant 0 : i32
    %c0_i32_0 = arith.constant 0 : i32
    %c0_i32_1 = arith.constant 0 : i32
    return %arg0, %c0_i32, %arg1, %c0_i32_0 : i32, i32, i32, i32
  }
}

</mosaic_0001>

<llo_original>
// kernel: tpu_custom_call.1
$region0: #{tpu_custom_call.1}
  #allocation0 [shape = 'u32[]', space=smem, size = 0x4, offset = 0x4, fixed_abs, tag = 'smem constant byte address 0x4 - core index']
  #allocation1 [shape = 'u32[72,128]{1,0:T(1,128)}', space=vmem, size = 0x9000, scoped, tag = 'internal scratch']
  #allocation9 [shape = 's32[]', space=sflag, size = 0x4, offset = 0, fixed_abs, tag = 'sflag constant byte address 0x0 - dummy sync flag']
  #allocation11 [shape = 's32[]', space=sflag, size = 0x4, offset = 0, fixed_abs, tag = 'sflag constant byte address 0x0 - dummy sync flag']
  %s0 = inlined_call_operand.hbm [shape: f32[2,4,32,128], index: 0, kind: input, shape index: {}]
  %s1 = inlined_call_operand.hbm [shape: f32[2,4,32,128], index: 1, kind: input, shape index: {}]
  %s2 = inlined_call_operand.hbm [shape: f32[4,12], index: 2, kind: input, shape index: {}]
  %s3 = inlined_call_operand.hbm [shape: f32[2,4,32,128], index: 3, kind: output, shape index: {}]
  %s4 = sld [smem:[#allocation0]]
  $region57: #{tpu_custom_call.1} parent=0
    _
  %s6 = ssub.s32 1, %s4
  %s7 = scalar_select 0, %s6, %s4
  $region1: #{tpu_custom_call.1} parent=0
    #allocation2 [shape = 'u8[32768]{0}', space=vmem, size = 0x8000, scoped, tag = 'input window, operand 0']
    #allocation3 [shape = 's32[2]{0}', space=sflag, size = 0x8, scoped, tag = 'scoped memory for tpu_custom_call.1']
    #allocation4 [shape = 's32[2]{0}', space=sflag, size = 0x8, scoped, tag = 'scoped memory for tpu_custom_call.1']
    #allocation5 [shape = 'u8[65536]{0}', space=vmem, size = 0x10000, scoped, tag = 'input window, operand 1']
    #allocation6 [shape = 's32[2]{0}', space=sflag, size = 0x8, scoped, tag = 'scoped memory for tpu_custom_call.1']
    #allocation7 [shape = 'u8[2048]{0}', space=vmem, size = 0x800, scoped, tag = 'input window, operand 2, single buffered']
    #allocation8 [shape = 'u8[65536]{0}', space=vmem, size = 0x10000, scoped, tag = 'output window, operand 0']
    %8 = vsyncpa [#allocation3], 0
    %s9 = scalar_lea.sflag [#allocation3], 1
    %10 = vsyncpa %s9, 0
    %11 = vsyncpa [#allocation6], 0
    %s12 = scalar_lea.sflag [#allocation6], 1
    %13 = vsyncpa %s12, 0
    %14 = vsyncpa [#allocation4], 0
    %s15 = scalar_lea.sflag [#allocation4], 1
    %16 = vsyncpa %s15, 0
    loop: start=0, step=1, limit=6
    $region2: #{tpu_custom_call.1} parent=1 // loop_pre_header
      _
    $region3: #{tpu_custom_call.1} parent=1 // loop_header
      %s18 = sphi 0, %s22
      %p19 = scmp.ge.s32.totalorder %s18, 6
      %s25 = sphi 0, %s37
      %s26 = sphi 0, %s33
      %s27 = sphi 0, %s25
      %s28 = sphi 0, %s26
      %s29 = sphi 0, %s27
      %s30 = sphi 0, %s28
      %s50 = sphi 0, %s52
      %s53 = sphi 0, %s50
      %s54 = sphi 0, %s53
      %s70 = sphi 0, %s54
      %s78 = sphi 0, %s80
      %s81 = sphi 0, %s78
      %s82 = sphi 0, %s81
      %s98 = sphi 0, %s82
      %s102 = sphi 0, %s102
      %s104 = sphi 0, %s102
      %s105 = sphi 0, %s104
      %s119 = sphi 0, %s105
      %s127 = sphi 0, %s129
      %s130 = sphi 0, %s127
      %s131 = sphi 0, %s130
      %s147 = sphi 0, %s131
    $region4: #{tpu_custom_call.1} parent=1 // loop_header_branch
      %21 = sbr.rel (%p19) target = $region8
    $region5: #{tpu_custom_call.1} parent=1 // loop_body
      %s23 = ssub.s32 %s18, 1
      %s24 = ssub.s32 %s18, 2
      %s31 = sadd.s32 1, %s26
      %p32 = scmp.ge.s32.totalorder %s31, 2
      %s33 = scalar_select %p32, 0, %s31
      %s34 = sadd.s32 1, %s25
      %s35 = scalar_select %p32, %s34, %s25
      %p36 = scmp.ge.s32.totalorder %s35, 2
      %s37 = scalar_select %p36, 0, %s35
      %s38 = smul.u32 %s26, 2
      %s39 = ssub.s32 %s38, 1
      %p40 = scmp.gt.s32.totalorder %s39, 0
      %s41 = scalar_select %p40, %s39, 0
      %s42 = smul.u32 %s33, 2
      %s43 = ssub.s32 %s42, 1
      %p44 = scmp.gt.s32.totalorder %s43, 0
      %s45 = scalar_select %p44, %s43, 0
      %s46 = ssub.s32 %s25, %s37
      %s47 = ssub.s32 %s41, %s45
      %s48 = sor.u32 %s46, %s47
      %p49 = scmp.eq.s32.totalorder %s48, 0
      %s51 = sadd.s32 %s50, 1
      %s52 = scalar_select %p49, %s50, %s51
      %p55 = pneg %p49
      %p56 = scmp.eq.s32.totalorder %s18, 3
      %p57 = por %p55, %p56
      %p58 = scmp.ne.s32.totalorder %s50, %s53
      %p59 = scmp.eq.s32.totalorder %s18, 0
      %p60 = por %p58, %p59
      %p61 = scmp.ne.s32.totalorder %s50, %s53
      %p62 = scmp.eq.s32.totalorder %s23, 3
      %p63 = por %p61, %p62
      %p64 = scmp.ne.s32.totalorder %s53, %s54
      %p65 = scmp.eq.s32.totalorder %s23, 0
      %p66 = por %p64, %p65
      %p67 = scmp.ne.s32.totalorder %s53, %s54
      %p68 = scmp.eq.s32.totalorder %s24, 3
      %p69 = por %p67, %p68
      %p71 = scmp.ne.s32.totalorder %s54, %s70
      %p72 = scmp.eq.s32.totalorder %s24, 0
      %p73 = por %p71, %p72
      %s74 = ssub.s32 %s25, %s37
      %s75 = ssub.s32 %s26, %s33
      %s76 = sor.u32 %s74, %s75
      %p77 = scmp.eq.s32.totalorder %s76, 0
      %s79 = sadd.s32 %s78, 1
      %s80 = scalar_select %p77, %s78, %s79
      %p83 = pneg %p77
      %p84 = scmp.eq.s32.totalorder %s18, 3
      %p85 = por %p83, %p84
      %p86 = scmp.ne.s32.totalorder %s78, %s81
      %p87 = scmp.eq.s32.totalorder %s18, 0
      %p88 = por %p86, %p87
      %p89 = scmp.ne.s32.totalorder %s78, %s81
      %p90 = scmp.eq.s32.totalorder %s23, 3
      %p91 = por %p89, %p90
      %p92 = scmp.ne.s32.totalorder %s81, %s82
      %p93 = scmp.eq.s32.totalorder %s23, 0
      %p94 = por %p92, %p93
      %p95 = scmp.ne.s32.totalorder %s81, %s82
      %p96 = scmp.eq.s32.totalorder %s24, 3
      %p97 = por %p95, %p96
      %p99 = scmp.ne.s32.totalorder %s82, %s98
      %p100 = scmp.eq.s32.totalorder %s24, 0
      %p101 = por %p99, %p100
      %s103 = sadd.s32 %s102, 1
      %p106 = scmp.eq.s32.totalorder %s18, 3
      %p107 = scmp.ne.s32.totalorder %s102, %s104
      %p108 = scmp.eq.s32.totalorder %s18, 0
      %p109 = por %p107, %p108
      %p110 = scmp.ne.s32.totalorder %s102, %s104
      %p111 = scmp.eq.s32.totalorder %s23, 3
      %p112 = por %p110, %p111
      %p113 = scmp.ne.s32.totalorder %s104, %s105
      %p114 = scmp.eq.s32.totalorder %s23, 0
      %p115 = por %p113, %p114
      %p116 = scmp.ne.s32.totalorder %s104, %s105
      %p117 = scmp.eq.s32.totalorder %s24, 3
      %p118 = por %p116, %p117
      %p120 = scmp.ne.s32.totalorder %s105, %s119
      %p121 = scmp.eq.s32.totalorder %s24, 0
      %p122 = por %p120, %p121
      %s123 = ssub.s32 %s25, %s37
      %s124 = ssub.s32 %s26, %s33
      %s125 = sor.u32 %s123, %s124
      %p126 = scmp.eq.s32.totalorder %s125, 0
      %s128 = sadd.s32 %s127, 1
      %s129 = scalar_select %p126, %s127, %s128
      %p132 = pneg %p126
      %p133 = scmp.eq.s32.totalorder %s18, 3
      %p134 = por %p132, %p133
      %p135 = scmp.ne.s32.totalorder %s127, %s130
      %p136 = scmp.eq.s32.totalorder %s18, 0
      %p137 = por %p135, %p136
      %p138 = scmp.ne.s32.totalorder %s127, %s130
      %p139 = scmp.eq.s32.totalorder %s23, 3
      %p140 = por %p138, %p139
      %p141 = scmp.ne.s32.totalorder %s130, %s131
      %p142 = scmp.eq.s32.totalorder %s23, 0
      %p143 = por %p141, %p142
      %p144 = scmp.ne.s32.totalorder %s130, %s131
      %p145 = scmp.eq.s32.totalorder %s24, 3
      %p146 = por %p144, %p145
      %p148 = scmp.ne.s32.totalorder %s131, %s147
      %p149 = scmp.eq.s32.totalorder %s24, 0
      %p150 = por %p148, %p149
      %p151 = scmp.le.s32.totalorder 1, %s18
      %p152 = scmp.lt.s32.totalorder %s18, 5
      %p153 = pnand %p151, %p152
      %p154 = pneg %p153
      // Predicated region
      $region9: #{tpu_custom_call.1} parent=5 // pred_check
        _
      $region10: #{tpu_custom_call.1} parent=5 // pred_check_branch
        %156 = sbr.rel (%p153) target = $region12
      $region11: #{tpu_custom_call.1} parent=5 // pred_region
        %s157 = ssub.s32 %s18, 1
        // Predicated region
        $region13: #{tpu_custom_call.1} parent=11 // pred_check
          %p158 = pneg %p115
        $region14: #{tpu_custom_call.1} parent=11 // pred_check_branch
          %160 = sbr.rel (%p158) target = $region16
        $region15: #{tpu_custom_call.1} parent=11 // pred_region
          %162 = vsyncadd [#allocation6], 0
          %s164 = sshll.u32 %s2, 4
          %s165 = int_to_ptr.hbm [resolvable:$true] %s164
          %s166 = sshll.u32 [#allocation7], 4
          %s167 = int_to_ptr.vmem [resolvable:$true] %s166
          %169 = dma.hbm_to_vmem [thread:$0]  %s165, 64, %s167, [#allocation6]
        $region16: #{tpu_custom_call.1} parent=11 // pred_fallthru
          _
      $region12: #{tpu_custom_call.1} parent=5 // pred_fallthru
        _
      %p170 = scmp.lt.s32.totalorder %s18, 4
      // Predicated region
      $region17: #{tpu_custom_call.1} parent=5 // pred_check
        %p171 = pneg %p170
      $region18: #{tpu_custom_call.1} parent=5 // pred_check_branch
        %173 = sbr.rel (%p171) target = $region20
      $region19: #{tpu_custom_call.1} parent=5 // pred_region
        // Predicated region
        $region21: #{tpu_custom_call.1} parent=19 // pred_check
          %p174 = pneg %p60
        $region22: #{tpu_custom_call.1} parent=19 // pred_check_branch
          %176 = sbr.rel (%p174) target = $region24
        $region23: #{tpu_custom_call.1} parent=19 // pred_region
          %s177 = sand.u32 %s50, 1
          %s178 = scalar_lea.sflag [#allocation3], %s177
          %s179 = sand.u32 %s50, 1
          %s180 = smul.addr %s179, 32
          %s181 = scalar_lea.vmem [#allocation2], %s180
          %s182 = smul.u32 %s26, 2
          %s183 = ssub.s32 %s182, 1
          %p184 = scmp.gt.s32.totalorder %s183, 0
          %s185 = scalar_select %p184, %s183, 0
          %187 = vsyncadd %s178, 0
          %s188 = smul.addr %s25, 16
          %s189 = sadd.s32 %s185, %s188
          %s190 = smul.addr %s189, 8
          %s191 = scalar_lea.hbm %s0, %s190
          %s192 = sshll.u32 %s191, 4
          %s193 = int_to_ptr.hbm [resolvable:$true] %s192
          %s194 = sshll.u32 %s181, 4
          %s195 = int_to_ptr.vmem [resolvable:$true] %s194
          %200 = dma.hbm_to_vmem [thread:$0]  %s193, 512, %s195, %s178, 512, 128, 8
        $region24: #{tpu_custom_call.1} parent=19 // pred_fallthru
          _
        // Predicated region
        $region25: #{tpu_custom_call.1} parent=19 // pred_check
          %p201 = pneg %p88
        $region26: #{tpu_custom_call.1} parent=19 // pred_check_branch
          %203 = sbr.rel (%p201) target = $region28
        $region27: #{tpu_custom_call.1} parent=19 // pred_region
          #allocation10 [shape = 'u32[6]{0}', space=smem, size = 0x18, scoped, tag = 'DMA stride descriptor']
          %s204 = sand.u32 %s18, 1
          %s205 = scalar_lea.sflag [#allocation6], %s204
          %s206 = sand.u32 %s78, 1
          %s207 = smul.addr %s206, 64
          %s208 = scalar_lea.vmem [#allocation5], %s207
          %s209 = smul.u32 2, %s26
          %211 = vsyncadd %s205, 0
          %s212 = smul.addr %s25, 16
          %s213 = sadd.s32 %s209, %s212
          %s214 = smul.addr %s213, 8
          %s215 = scalar_lea.hbm %s1, %s214
          %s217 = sshll.u32 1, 14
          %s218 = sxor.u32 4294967295, %s217
          %s220 = sld [smem:[#allocation0]]
          %s221 = sadd.s32 2, %s220
          %s223 = sshll.u32 7, 26
          %s224 = sxor.u32 4294967295, %s223
          %s225 = sand.u32 0, %s224
          %s226 = sshll.u32 %s221, 26
          %s227 = sor.u32 %s225, %s226
          %s228 = sshll.u32 %s215, 4
          %s229 = int_to_ptr.hbm [resolvable:$true] %s228
          %s230 = sshll.u32 %s208, 4
          %s231 = int_to_ptr.vmem [resolvable:$true] %s230
          %237 = sst [smem:[#allocation10]] 512
          %s238 = scalar_lea.smem [#allocation10], 1
          %239 = sst [smem:[%s238]] 256
          %s240 = scalar_lea.smem [#allocation10], 2
          %241 = sst [smem:[%s240]] 2
          %s242 = scalar_lea.smem [#allocation10], 3
          %243 = sst [smem:[%s242]] 128
          %s244 = scalar_lea.smem [#allocation10], 4
          %245 = sst [smem:[%s244]] 128
          %s246 = scalar_lea.smem [#allocation10], 5
          %247 = sst [smem:[%s246]] 8
          %249 = dma.general %s229, 1024, %s231, %s205, [#allocation9], [#allocation10], %s227, 0
        $region28: #{tpu_custom_call.1} parent=19 // pred_fallthru
          _
      $region20: #{tpu_custom_call.1} parent=5 // pred_fallthru
        _
      %p250 = scmp.le.s32.totalorder 1, %s18
      %p251 = scmp.lt.s32.totalorder %s18, 5
      %p252 = pnand %p250, %p251
      %p253 = pneg %p252
      // Predicated region
      $region29: #{tpu_custom_call.1} parent=5 // pred_check
        _
      $region30: #{tpu_custom_call.1} parent=5 // pred_check_branch
        %255 = sbr.rel (%p252) target = $region32
      $region31: #{tpu_custom_call.1} parent=5 // pred_region
        %s256 = ssub.s32 %s18, 1
        %s257 = sand.u32 %s53, 1
        %s258 = scalar_lea.sflag [#allocation3], %s257
        %s259 = sand.u32 %s53, 1
        %s260 = smul.addr %s259, 32
        %s261 = scalar_lea.vmem [#allocation2], %s260
        // Predicated region
        $region33: #{tpu_custom_call.1} parent=31 // pred_check
          %p262 = pneg %p66
        $region34: #{tpu_custom_call.1} parent=31 // pred_check_branch
          %264 = sbr.rel (%p262) target = $region36
        $region35: #{tpu_custom_call.1} parent=31 // pred_region
          %266 = dma.done %s258, 512
        $region36: #{tpu_custom_call.1} parent=31 // pred_fallthru
          _
        %s267 = sand.u32 %s23, 1
        %s268 = scalar_lea.sflag [#allocation6], %s267
        %s269 = sand.u32 %s81, 1
        %s270 = smul.addr %s269, 64
        %s271 = scalar_lea.vmem [#allocation5], %s270
        // Predicated region
        $region37: #{tpu_custom_call.1} parent=31 // pred_check
          %p272 = pneg %p94
        $region38: #{tpu_custom_call.1} parent=31 // pred_check_branch
          %274 = sbr.rel (%p272) target = $region40
        $region39: #{tpu_custom_call.1} parent=31 // pred_region
          %276 = dma.done %s268, 1024
        $region40: #{tpu_custom_call.1} parent=31 // pred_fallthru
          _
        // Predicated region
        $region41: #{tpu_custom_call.1} parent=31 // pred_check
          %p277 = pneg %p115
        $region42: #{tpu_custom_call.1} parent=31 // pred_check_branch
          %279 = sbr.rel (%p277) target = $region44
        $region43: #{tpu_custom_call.1} parent=31 // pred_region
          %281 = dma.done [#allocation6], 64
        $region44: #{tpu_custom_call.1} parent=31 // pred_fallthru
          _
        %s282 = sand.u32 %s53, 1
        %s283 = scalar_lea.sflag [#allocation3], %s282
        %s284 = sand.u32 %s53, 1
        %s285 = smul.addr %s284, 32
        %s286 = scalar_lea.vmem [#allocation2], %s285
        %p287 = pneg %p66
        %p288 = pneg %p63
        %s289 = sand.u32 %s23, 1
        %s290 = scalar_lea.sflag [#allocation6], %s289
        %s291 = sand.u32 %s81, 1
        %s292 = smul.addr %s291, 64
        %s293 = scalar_lea.vmem [#allocation5], %s292
        %p294 = pneg %p94
        %p295 = pneg %p91
        %p296 = pneg %p115
        %p297 = pneg %p112
        %p298 = pneg %p143
        %p299 = pneg %p140
        %s300 = sand.u32 %s130, 1
        %s301 = scalar_lea.sflag [#allocation4], %s300
        %s302 = sand.u32 %s130, 1
        %s303 = smul.addr %s302, 64
        %s304 = scalar_lea.vmem [#allocation8], %s303
        %s305 = smul.u32 %s28, 2
        %s306 = ssub.s32 %s305, 1
        %p307 = scmp.gt.s32.totalorder %s306, 0
        %s308 = scalar_select %p307, %s306, 0
        %s309 = smul.u32 2, %s28
        %s310 = smul.u32 2, %s28
        %v311 = vld [vmem:[%s271] sm:$0xff]
        %v312 = vld [vmem:[%s271 + $0x8] sm:$0xff]
        %v313 = vld [vmem:[%s271 + $0x10] sm:$0xff]
        %v314 = vld [vmem:[%s271 + $0x18] sm:$0xff]
        %v315 = vld [vmem:[%s271 + $0x20] sm:$0xff]
        %v316 = vld [vmem:[%s271 + $0x28] sm:$0xff]
        %v317 = vld [vmem:[%s271 + $0x30] sm:$0xff]
        %v318 = vld [vmem:[%s271 + $0x38] sm:$0xff]
        %319 = vadd.xlane.f32.xlu0 %v311
        %v320 = vpop.xlane.xlu0 %319
        %321 = vadd.xlane.f32.xlu0 %v312
        %v322 = vpop.xlane.xlu0 %321
        %323 = vadd.xlane.f32.xlu0 %v313
        %v324 = vpop.xlane.xlu0 %323
        %325 = vadd.xlane.f32.xlu0 %v314
        %v326 = vpop.xlane.xlu0 %325
        %327 = vadd.xlane.f32.xlu0 %v315
        %v328 = vpop.xlane.xlu0 %327
        %329 = vadd.xlane.f32.xlu0 %v316
        %v330 = vpop.xlane.xlu0 %329
        %331 = vadd.xlane.f32.xlu0 %v317
        %v332 = vpop.xlane.xlu0 %331
        %333 = vadd.xlane.f32.xlu0 %v318
        %v334 = vpop.xlane.xlu0 %333
        %v335 = vmul.f32 %v320, 0.0078125
        %v336 = vmul.f32 %v322, 0.0078125
        %v337 = vmul.f32 %v324, 0.0078125
        %v338 = vmul.f32 %v326, 0.0078125
        %v339 = vmul.f32 %v328, 0.0078125
        %v340 = vmul.f32 %v330, 0.0078125
        %v341 = vmul.f32 %v332, 0.0078125
        %v342 = vmul.f32 %v334, 0.0078125
        %v343 = vld [vmem:[%s261] sm:$0xff]
        %v344 = vld [vmem:[%s261 + $0x8] sm:$0xff]
        %v345 = vld [vmem:[%s261 + $0x10] sm:$0xff]
        %v346 = vld [vmem:[%s261 + $0x18] sm:$0xff]
        %347 = vadd.xlane.f32.xlu0 %v343
        %v348 = vpop.xlane.xlu0 %347
        %349 = vadd.xlane.f32.xlu0 %v344
        %v350 = vpop.xlane.xlu0 %349
        %351 = vadd.xlane.f32.xlu0 %v345
        %v352 = vpop.xlane.xlu0 %351
        %353 = vadd.xlane.f32.xlu0 %v346
        %v354 = vpop.xlane.xlu0 %353
        %v355 = vmul.f32 %v348, 0.0078125
        %v356 = vmul.f32 %v350, 0.0078125
        %v357 = vmul.f32 %v352, 0.0078125
        %v358 = vmul.f32 %v354, 0.0078125
        %p359 = scmp.gt.s32.totalorder %s28, 0
        %s360 = scalar_select %p359, 1, 0
        %s361 = scvt.s32.f32 %s360
        %v362 = vstv %s361
        %v363 = vmul.f32 %v355, %v362
        %v364 = vmul.f32 %v356, %v362
        %v365 = vmul.f32 %v357, %v362
        %v366 = vmul.f32 %v358, %v362
        %v371 = vlaneseq
        %v372 = vand.u32 %v371, 127
        %v373 = vadd.s32 %v372, 6
        %v374 = vperm.slane %v363, %v373
        %v375 = vperm.slane %v364, %v373
        %v376 = vperm.slane %v365, %v373
        %v377 = vperm.slane %v366, %v373
        %vm378 = vcmask 1047559
        %v379 = vsel %vm378, %v375, %v374
        %vm380 = vcmask 1041409
        %v381 = vsel %vm380, %v377, %v376
        %v392 = vadd.s32 %v372, 4294967294
        %v393 = vperm.slane %v335, %v392
        %v394 = vadd.s32 %v372, 4294967286
        %v395 = vperm.slane %v336, %v394
        %vm396 = vcmask 146512
        %v397 = vsel %vm396, %v395, %v393
        %v398 = vperm.slane %v337, %v392
        %v399 = vperm.slane %v338, %v394
        %v400 = vsel %vm396, %v399, %v398
        %v401 = vperm.slane %v339, %v392
        %v402 = vperm.slane %v340, %v394
        %v403 = vsel %vm396, %v402, %v401
        %v404 = vperm.slane %v341, %v392
        %v405 = vperm.slane %v342, %v394
        %v406 = vsel %vm396, %v405, %v404
        %v407 = vsel %vm378, %v400, %v397
        %v408 = vsel %vm380, %v406, %v403
        %vm411 = vcmask 15360
        %v412 = vsel %vm411, %v379, %v407
        %v413 = vsel %vm411, %v381, %v408
        %vm416 = vcmask 1041408
        %v417 = vrot.slane %v412, 6
        %v418 = vrot.slane %v413, 6
        %v419 = vsel %vm416, %v417, %v418
        %vm421 = vcmask 1045504
        %v422 = vrot.slane %v412, 2
        %v423 = vrot.slane %v413, 2
        %v424 = vsel %vm421, %v422, %v423
        %425 = vrot.lane.b32.xlu0 %v424, 127
        %v426 = vpop.permute.xlu0 %425
        %428 = vrot.lane.b32.xlu0 %v419, 126
        %v429 = vpop.permute.xlu0 %428
        %vm431 = vcmask 1043456
        %v432 = vsel %vm431, %v419, %v426
        %v433 = vld [vmem:[#allocation7] sm:$0xf]
        %v434 = vperm.slane %v433, 0
        %v435 = vlaneseq
        %v436 = vshrl.u32 %v435, 7
        %438 = vset.pattern.permute.xlu0 %v436
        %439 = vperm.xlu0 %438, %v434
        %v440 = vpop.permute.xlu0 %439
        %v441 = vlaneseq
        %v442 = vshrl.u32 %v441, 7
        %v443 = vadd.s32 %v442, 8
        %444 = vset.pattern.permute.xlu0 %v443
        %445 = vperm.xlu0 %444, %v434
        %v446 = vpop.permute.xlu0 %445
        %v447 = vperm.slane %v433, 1
        %v448 = vlaneseq
        %v449 = vshrl.u32 %v448, 7
        %451 = vset.pattern.permute.xlu0 %v449
        %452 = vperm.xlu0 %451, %v447
        %v453 = vpop.permute.xlu0 %452
        %v454 = vlaneseq
        %v455 = vshrl.u32 %v454, 7
        %v456 = vadd.s32 %v455, 8
        %457 = vset.pattern.permute.xlu0 %v456
        %458 = vperm.xlu0 %457, %v447
        %v459 = vpop.permute.xlu0 %458
        %v460 = vperm.slane %v433, 2
        %v461 = vlaneseq
        %v462 = vshrl.u32 %v461, 7
        %464 = vset.pattern.permute.xlu0 %v462
        %465 = vperm.xlu0 %464, %v460
        %v466 = vpop.permute.xlu0 %465
        %v467 = vlaneseq
        %v468 = vshrl.u32 %v467, 7
        %v469 = vadd.s32 %v468, 8
        %470 = vset.pattern.permute.xlu0 %v469
        %471 = vperm.xlu0 %470, %v460
        %v472 = vpop.permute.xlu0 %471
        %v473 = vperm.slane %v433, 3
        %v474 = vlaneseq
        %v475 = vshrl.u32 %v474, 7
        %477 = vset.pattern.permute.xlu0 %v475
        %478 = vperm.xlu0 %477, %v473
        %v479 = vpop.permute.xlu0 %478
        %v480 = vlaneseq
        %v481 = vshrl.u32 %v480, 7
        %v482 = vadd.s32 %v481, 8
        %483 = vset.pattern.permute.xlu0 %v482
        %484 = vperm.xlu0 %483, %v473
        %v485 = vpop.permute.xlu0 %484
        %v486 = vmul.f32 %v440, %v432
        %v487 = vmul.f32 %v446, %v429
        %v488 = vmul.f32 %v453, %v432
        %v489 = vmul.f32 %v459, %v429
        %v490 = vmul.f32 %v466, %v432
        %v491 = vmul.f32 %v472, %v429
        %v492 = vmul.f32 %v479, %v432
        %v493 = vmul.f32 %v485, %v429
        %vm494 = vcmask 130048
        %v495 = vsel %vm494, %v486, 0.0
        %vm496 = vcmask 125952
        %v497 = vsel %vm496, %v487, 0.0
        %v498 = vadd.f32 %v495, %v497
        %v499 = vrot.slane %v498, 4
        %v500 = vadd.f32 %v498, %v499
        %v501 = vrot.slane %v500, 2
        %v502 = vadd.f32 %v500, %v501
        %v503 = vrot.slane %v502, 1
        %v504 = vadd.f32 %v502, %v503
        %v505 = vsel %vm494, %v488, 0.0
        %v506 = vsel %vm496, %v489, 0.0
        %v507 = vadd.f32 %v505, %v506
        %v508 = vrot.slane %v507, 4
        %v509 = vadd.f32 %v507, %v508
        %v510 = vrot.slane %v509, 2
        %v511 = vadd.f32 %v509, %v510
        %v512 = vrot.slane %v511, 1
        %v513 = vadd.f32 %v511, %v512
        %v514 = vsel %vm494, %v490, 0.0
        %v515 = vsel %vm496, %v491, 0.0
        %v516 = vadd.f32 %v514, %v515
        %v517 = vrot.slane %v516, 4
        %v518 = vadd.f32 %v516, %v517
        %v519 = vrot.slane %v518, 2
        %v520 = vadd.f32 %v518, %v519
        %v521 = vrot.slane %v520, 1
        %v522 = vadd.f32 %v520, %v521
        %v523 = vsel %vm494, %v492, 0.0
        %v524 = vsel %vm496, %v493, 0.0
        %v525 = vadd.f32 %v523, %v524
        %v526 = vrot.slane %v525, 4
        %v527 = vadd.f32 %v525, %v526
        %v528 = vrot.slane %v527, 2
        %v529 = vadd.f32 %v527, %v528
        %v530 = vrot.slane %v529, 1
        %v531 = vadd.f32 %v529, %v530
        %v532 = vlaneseq
        %v533 = vshrl.u32 %v532, 7
        %535 = vset.pattern.permute.xlu0 %v533
        %536 = vperm.xlu0 %535, %v504
        %v537 = vpop.permute.xlu0 %536
        %v538 = vlaneseq
        %v539 = vshrl.u32 %v538, 7
        %v540 = vadd.s32 %v539, 8
        %541 = vset.pattern.permute.xlu0 %v540
        %542 = vperm.xlu0 %541, %v504
        %v543 = vpop.permute.xlu0 %542
        %v544 = vlaneseq
        %v545 = vshrl.u32 %v544, 7
        %547 = vset.pattern.permute.xlu0 %v545
        %548 = vperm.xlu0 %547, %v513
        %v549 = vpop.permute.xlu0 %548
        %v550 = vlaneseq
        %v551 = vshrl.u32 %v550, 7
        %v552 = vadd.s32 %v551, 8
        %553 = vset.pattern.permute.xlu0 %v552
        %554 = vperm.xlu0 %553, %v513
        %v555 = vpop.permute.xlu0 %554
        %v556 = vlaneseq
        %v557 = vshrl.u32 %v556, 7
        %559 = vset.pattern.permute.xlu0 %v557
        %560 = vperm.xlu0 %559, %v522
        %v561 = vpop.permute.xlu0 %560
        %v562 = vlaneseq
        %v563 = vshrl.u32 %v562, 7
        %v564 = vadd.s32 %v563, 8
        %565 = vset.pattern.permute.xlu0 %v564
        %566 = vperm.xlu0 %565, %v522
        %v567 = vpop.permute.xlu0 %566
        %v568 = vlaneseq
        %v569 = vshrl.u32 %v568, 7
        %571 = vset.pattern.permute.xlu0 %v569
        %572 = vperm.xlu0 %571, %v531
        %v573 = vpop.permute.xlu0 %572
        %v574 = vlaneseq
        %v575 = vshrl.u32 %v574, 7
        %v576 = vadd.s32 %v575, 8
        %577 = vset.pattern.permute.xlu0 %v576
        %578 = vperm.xlu0 %577, %v531
        %v579 = vpop.permute.xlu0 %578
        %v580 = vmul.f32 %v311, %v537
        %v581 = vmul.f32 %v312, %v543
        %v582 = vmul.f32 %v313, %v549
        %v583 = vmul.f32 %v314, %v555
        %v584 = vmul.f32 %v315, %v561
        %v585 = vmul.f32 %v316, %v567
        %v586 = vmul.f32 %v317, %v573
        %v587 = vmul.f32 %v318, %v579
        %588 = vst [vmem:[%s304] sm:$0xff] %v580
        %589 = vst [vmem:[%s304 + $0x8] sm:$0xff] %v581
        %590 = vst [vmem:[%s304 + $0x10] sm:$0xff] %v582
        %591 = vst [vmem:[%s304 + $0x18] sm:$0xff] %v583
        %592 = vst [vmem:[%s304 + $0x20] sm:$0xff] %v584
        %593 = vst [vmem:[%s304 + $0x28] sm:$0xff] %v585
        %594 = vst [vmem:[%s304 + $0x30] sm:$0xff] %v586
        %595 = vst [vmem:[%s304 + $0x38] sm:$0xff] %v587
        %s596 = sand.u32 %s130, 1
        %s597 = scalar_lea.sflag [#allocation4], %s596
        %s598 = sand.u32 %s130, 1
        %s599 = smul.addr %s598, 64
        %s600 = scalar_lea.vmem [#allocation8], %s599
        // Predicated region
        $region45: #{tpu_custom_call.1} parent=31 // pred_check
          %p601 = pneg %p140
        $region46: #{tpu_custom_call.1} parent=31 // pred_check_branch
          %603 = sbr.rel (%p601) target = $region48
        $region47: #{tpu_custom_call.1} parent=31 // pred_region
          #allocation12 [shape = 'u32[6]{0}', space=smem, size = 0x18, scoped, tag = 'DMA stride descriptor']
          %s604 = smul.u32 2, %s28
          %606 = vsyncadd %s597, 0
          %s607 = smul.addr %s27, 16
          %s608 = sadd.s32 %s604, %s607
          %s609 = smul.addr %s608, 8
          %s610 = scalar_lea.hbm %s3, %s609
          %s612 = sshll.u32 1, 14
          %s613 = sxor.u32 4294967295, %s612
          %s616 = sshll.u32 7, 18
          %s617 = sxor.u32 4294967295, %s616
          %s618 = sand.u32 0, %s617
          %s620 = sor.u32 %s618, 0
          %s621 = sshll.u32 %s600, 4
          %s622 = int_to_ptr.vmem [resolvable:$true] %s621
          %s623 = sshll.u32 %s610, 4
          %s624 = int_to_ptr.hbm [resolvable:$true] %s623
          %630 = sst [smem:[#allocation12]] 256
          %s631 = scalar_lea.smem [#allocation12], 1
          %632 = sst [smem:[%s631]] 512
          %s633 = scalar_lea.smem [#allocation12], 2
          %634 = sst [smem:[%s633]] 2
          %s635 = scalar_lea.smem [#allocation12], 3
          %636 = sst [smem:[%s635]] 128
          %s637 = scalar_lea.smem [#allocation12], 4
          %638 = sst [smem:[%s637]] 128
          %s639 = scalar_lea.smem [#allocation12], 5
          %640 = sst [smem:[%s639]] 8
          %642 = dma.general %s622, 1024, %s624, %s597, [#allocation11], [#allocation12], %s620, 0
        $region48: #{tpu_custom_call.1} parent=31 // pred_fallthru
          _
      $region32: #{tpu_custom_call.1} parent=5 // pred_fallthru
        _
      %p643 = scmp.le.s32.totalorder 2, %s18
      // Predicated region
      $region49: #{tpu_custom_call.1} parent=5 // pred_check
        %p644 = pneg %p643
      $region50: #{tpu_custom_call.1} parent=5 // pred_check_branch
        %646 = sbr.rel (%p644) target = $region52
      $region51: #{tpu_custom_call.1} parent=5 // pred_region
        %s647 = ssub.s32 %s18, 2
        // Predicated region
        $region53: #{tpu_custom_call.1} parent=51 // pred_check
          %p648 = pneg %p146
        $region54: #{tpu_custom_call.1} parent=51 // pred_check_branch
          %650 = sbr.rel (%p648) target = $region56
        $region55: #{tpu_custom_call.1} parent=51 // pred_region
          %s651 = sand.u32 %s131, 1
          %s652 = scalar_lea.sflag [#allocation4], %s651
          %s653 = sand.u32 %s131, 1
          %s654 = smul.addr %s653, 64
          %s655 = scalar_lea.vmem [#allocation8], %s654
          %657 = dma.done %s652, 1024
        $region56: #{tpu_custom_call.1} parent=51 // pred_fallthru
          _
      $region52: #{tpu_custom_call.1} parent=5 // pred_fallthru
        _
    $region6: #{tpu_custom_call.1} parent=1 // loop_footer
      %s22 = sadd.s32 1, %s18
    $region7: #{tpu_custom_call.1} parent=1 // loop_footer_branch
      %17 = sbr.rel target = $region3
    $region8: #{tpu_custom_call.1} parent=1 // loop_exit
      _
    %658 = vsyncpa [#allocation3], 1
    %s659 = scalar_lea.sflag [#allocation3], 1
    %660 = vsyncpa %s659, 1
    %661 = vsyncpa [#allocation6], 1
    %s662 = scalar_lea.sflag [#allocation6], 1
    %663 = vsyncpa %s662, 1
    %664 = vsyncpa [#allocation4], 1
    %s665 = scalar_lea.sflag [#allocation4], 1
    %666 = vsyncpa %s665, 1

</llo_original>
